<compile_context>
chip_gen: v7x
topology: tpu7x:2x2x1
jax: 0.10.0
libtpu: 0.0.40
codegen_flags: <defaults>
</compile_context>

<pallas_src>
import functools

import jax
import jax.numpy as jnp
from jax import lax
from jax.experimental import pallas as pl
from jax.experimental.pallas import tpu as pltpu


def _consecutive_rep_kernel(factor_ref, xi_ref, xj_ref, sqi_ref, sqj_ref,
                            out_ref, *, ti, tj):
    # factor_ref: (1,)      f32 in SMEM (runtime scalar)
    # xi_ref:     (TI, D)   i-side points tile
    # xj_ref:     (TJ, D)   j-side points tile
    # sqi_ref:    (TI, 1)   precomputed ||x_i||^2
    # sqj_ref:    (1, TJ)   precomputed ||x_j||^2
    # out_ref:    (TI, TJ)  distance tile
    i = pl.program_id(1)
    j = pl.program_id(2)
    row0 = i * ti
    col0 = j * tj

    # Gram tile on the MXU: contract the last dims of both operands (A . B^T)
    # in the input dtype, accumulating in f32.
    gram = lax.dot_general(
        xi_ref[...], xj_ref[...],
        dimension_numbers=(((1,), (1,)), ((), ())),
        preferred_element_type=jnp.float32,
    )                                                            # (TI, TJ)

    # ||xi - xj||^2 = ||xi||^2 + ||xj||^2 - 2 xi.xj   (norms precomputed)
    d2 = sqi_ref[...] + sqj_ref[...] - 2.0 * gram
    d = jnp.sqrt(jnp.maximum(d2, 0.0))

    # Only tiles intersecting the diagonal band (offsets 0 and +1) need the
    # exact-zero diagonal and the consecutive-pair scaling.
    touches_band = jnp.logical_and(col0 <= row0 + ti, col0 + tj > row0)

    @pl.when(touches_band)
    def _():
        # delta[r, c] = (global col) - (global row)
        delta = ((col0 - row0)
                 + lax.broadcasted_iota(jnp.int32, (ti, tj), 1)
                 - lax.broadcasted_iota(jnp.int32, (ti, tj), 0))
        factor = factor_ref[0]
        dd = jnp.where(delta == 0, 0.0, d)        # exact zero self-distance
        dd = jnp.where(delta == 1, dd * factor, dd)
        out_ref[...] = dd.astype(out_ref.dtype)

    @pl.when(jnp.logical_not(touches_band))
    def _():
        out_ref[...] = d.astype(out_ref.dtype)


def _round_up(n, m):
    return ((n + m - 1) // m) * m


def _pick_tile(n, preferred, align):
    """Tile size for one output axis.

    Returns the full dim for tiny n (always a legal block shape), otherwise an
    `align`-multiple capped at `preferred`.  The grid uses pl.cdiv, so a tile
    that overhangs N is handled by Pallas' padded reads / masked stores.
    """
    if n <= align:
        return n
    return min(_round_up(preferred, align), _round_up(n, align))


def consecutive_representation(x, factor=1.0):
    """Pallas equivalent of ConsecutiveRepresentation(metric='euclidean').

    x: (B, N, D) float array.  Returns (B, N, N) in x.dtype.
    `factor` may be a Python float or a traced JAX scalar (passed via SMEM).
    """
    B, N, D = x.shape
    itemsize = jnp.dtype(x.dtype).itemsize
    # dtype-aware sublane alignment for the i (row) axis of the output tile.
    align_i = {4: 8, 2: 16, 1: 32}.get(itemsize, 8)
    ti = _pick_tile(N, 256, align_i)    # sublane-aligned rows
    tj = _pick_tile(N, 1024, 128)       # lane-dense output columns

    # Precompute squared row norms once (removes the per-step XLU reduce and
    # the sublane->lane relayout inside the kernel).
    xf = x.astype(jnp.float32)
    sq = jnp.sum(xf * xf, axis=-1)                      # (B, N)
    sq_i = sq[:, :, None]                               # (B, N, 1)
    sq_j = sq[:, None, :]                               # (B, 1, N)

    factor_arr = jnp.asarray(factor, dtype=jnp.float32).reshape((1,))
    kernel = functools.partial(_consecutive_rep_kernel, ti=ti, tj=tj)

    grid = (B, pl.cdiv(N, ti), pl.cdiv(N, tj))
    return pl.pallas_call(
        kernel,
        out_shape=jax.ShapeDtypeStruct((B, N, N), x.dtype),
        grid_spec=pltpu.PrefetchScalarGridSpec(
            num_scalar_prefetch=0,
            grid=grid,
            in_specs=[
                # factor: whole (1,) array in SMEM (runtime scalar, no recompile)
                pl.BlockSpec(memory_space=pltpu.MemorySpace.SMEM),
                # i-side points: invariant in j -> stays VMEM-resident over j
                pl.BlockSpec((pl.Squeezed(), ti, D), lambda b, i, j: (b, i, 0)),
                # j-side points
                pl.BlockSpec((pl.Squeezed(), tj, D), lambda b, i, j: (b, j, 0)),
                # precomputed squared norms
                pl.BlockSpec((pl.Squeezed(), ti, 1), lambda b, i, j: (b, i, 0)),
                pl.BlockSpec((pl.Squeezed(), 1, tj), lambda b, i, j: (b, 0, j)),
            ],
            out_specs=pl.BlockSpec((pl.Squeezed(), ti, tj),
                                   lambda b, i, j: (b, i, j)),
        ),
        compiler_params=pltpu.CompilerParams(
            # No carried state -> every grid axis is independent; megacore can
            # shard b, i and j.
            dimension_semantics=("parallel", "parallel", "parallel"),
            # Explicit scoped-VMEM limit: safe on v5e (16 MiB default) and well
            # under v7x's 64 MiB physical; our footprint is ~2.3 MiB.
            vmem_limit_bytes=32 * 1024 * 1024,
        ),
    )(factor_arr, x, x, sq_i, sq_j)


def _reference(x, factor):
    diff = x[:, :, None, :] - x[:, None, :, :]
    ref = jnp.sqrt(jnp.sum(diff * diff, axis=-1))
    n = x.shape[1]
    idx = jnp.arange(n - 1)
    return ref.at[:, idx, idx + 1].multiply(factor)


if __name__ == "__main__":
    factor = 2.0                           # factor_init (scalar "parameter")

    # Small shape consistent with the module (batch=2, seq=8, hidden=32).
    B, N, D = 2, 8, 32
    x = jax.random.normal(jax.random.PRNGKey(0), (B, N, D), dtype=jnp.float32)
    out = jax.block_until_ready(consecutive_representation(x, factor=factor))
    ref = _reference(x, factor)
    assert out.shape == (B, N, N)
    assert jnp.allclose(out, ref, atol=1e-4, rtol=1e-4), (
        float(jnp.max(jnp.abs(out - ref))))

    # Larger shape: exercises the tiled (i, j) grid and band gating
    # (grid = (1, 2, 1) with 256x512 tiles).
    B2, N2, D2 = 1, 512, 32
    x2 = jax.random.normal(jax.random.PRNGKey(1), (B2, N2, D2), dtype=jnp.float32)
    out2 = jax.block_until_ready(consecutive_representation(x2, factor=factor))
    ref2 = _reference(x2, factor)
    assert out2.shape == (B2, N2, N2)
    assert jnp.allclose(out2, ref2, atol=1e-3, rtol=1e-3), (
        float(jnp.max(jnp.abs(out2 - ref2))))

    # Ragged N: exercises the cdiv grid with masked edge tiles
    # (ti=256 -> 2 i-tiles, last one partial; tj=512 overhangs N=456).
    B3, N3, D3 = 1, 456, 32
    x3 = jax.random.normal(jax.random.PRNGKey(2), (B3, N3, D3), dtype=jnp.float32)
    out3 = jax.block_until_ready(consecutive_representation(x3, factor=factor))
    ref3 = _reference(x3, factor)
    assert out3.shape == (B3, N3, N3)
    assert jnp.allclose(out3, ref3, atol=1e-3, rtol=1e-3), (
        float(jnp.max(jnp.abs(out3 - ref3))))

    print("KERNEL_OK")
</pallas_src>

<mosaic_0001>
module attributes {stable_mosaic.version = 11 : i64} {
  func.func @_consecutive_rep_kernel(%arg0: i32, %arg1: i32, %arg2: i32, %arg3: memref<1xf32, #tpu.memory_space<smem>>, %arg4: memref<1x8x32xf32, #tpu.memory_space<vmem>>, %arg5: memref<1x8x32xf32, #tpu.memory_space<vmem>>, %arg6: memref<1x8x1xf32, #tpu.memory_space<vmem>>, %arg7: memref<1x1x8xf32, #tpu.memory_space<vmem>>, %arg8: memref<1x8x8xf32, #tpu.memory_space<vmem>>) attributes {dimension_semantics = [#tpu.dimension_semantics<parallel>, #tpu.dimension_semantics<parallel>, #tpu.dimension_semantics<parallel>], iteration_bounds = array<i64: 2, 1, 1>, scalar_prefetch = 0 : i64, scratch_operands = 0 : i64, tpu.core_type = #tpu.core_type<tc>, window_params = [{transform_indices = @transform_0, window_bounds = array<i64: 1>}, {transform_indices = @transform_1, window_bounds = array<i64: 1, 8, 32>}, {transform_indices = @transform_2, window_bounds = array<i64: 1, 8, 32>}, {transform_indices = @transform_3, window_bounds = array<i64: 1, 8, 1>}, {transform_indices = @transform_4, window_bounds = array<i64: 1, 1, 8>}, {transform_indices = @transform_5, window_bounds = array<i64: 1, 8, 8>}]} {
    %c8_i32 = arith.constant 8 : i32
    %0 = arith.muli %arg1, %c8_i32 : i32
    %c8_i32_0 = arith.constant 8 : i32
    %1 = arith.muli %arg2, %c8_i32_0 : i32
    %c0 = arith.constant 0 : index
    %c0_1 = arith.constant 0 : index
    %c0_2 = arith.constant 0 : index
    %2 = vector.load %arg4[%c0, %c0_1, %c0_2] : memref<1x8x32xf32, #tpu.memory_space<vmem>>, vector<1x8x32xf32>
    %3 = vector.shape_cast %2 : vector<1x8x32xf32> to vector<8x32xf32>
    %c0_3 = arith.constant 0 : index
    %c0_4 = arith.constant 0 : index
    %c0_5 = arith.constant 0 : index
    %4 = vector.load %arg5[%c0_3, %c0_4, %c0_5] : memref<1x8x32xf32, #tpu.memory_space<vmem>>, vector<1x8x32xf32>
    %5 = vector.shape_cast %4 : vector<1x8x32xf32> to vector<8x32xf32>
    %cst = arith.constant dense<0.000000e+00> : vector<8x8xf32>
    %6 = tpu.matmul %3, %5, %cst {dimension_numbers = #tpu.dot_dimension_numbers<[1], [1], [0], [0], [0, 0, 1, 0], [], []>} : vector<8x32xf32>, vector<8x32xf32>, vector<8x8xf32> -> vector<8x8xf32>
    %c0_6 = arith.constant 0 : index
    %c0_7 = arith.constant 0 : index
    %c0_8 = arith.constant 0 : index
    %7 = vector.load %arg6[%c0_6, %c0_7, %c0_8] : memref<1x8x1xf32, #tpu.memory_space<vmem>>, vector<1x8x1xf32>
    %8 = vector.shape_cast %7 : vector<1x8x1xf32> to vector<8x1xf32>
    %c0_9 = arith.constant 0 : index
    %c0_10 = arith.constant 0 : index
    %c0_11 = arith.constant 0 : index
    %9 = vector.load %arg7[%c0_9, %c0_10, %c0_11] : memref<1x1x8xf32, #tpu.memory_space<vmem>>, vector<1x1x8xf32>
    %10 = vector.shape_cast %9 : vector<1x1x8xf32> to vector<1x8xf32>
    %11 = vector.broadcast %8 : vector<8x1xf32> to vector<8x8xf32>
    %12 = vector.broadcast %10 : vector<1x8xf32> to vector<8x8xf32>
    %13 = arith.addf %11, %12 : vector<8x8xf32>
    %cst_12 = arith.constant 2.000000e+00 : f32
    %14 = vector.broadcast %cst_12 : f32 to vector<8x8xf32>
    %15 = arith.mulf %14, %6 : vector<8x8xf32>
    %16 = arith.subf %13, %15 : vector<8x8xf32>
    %cst_13 = arith.constant 0.000000e+00 : f32
    %17 = vector.broadcast %cst_13 : f32 to vector<8x8xf32>
    %18 = arith.maximumf %16, %17 : vector<8x8xf32>
    %19 = math.sqrt %18 : vector<8x8xf32>
    %c8_i32_14 = arith.constant 8 : i32
    %20 = arith.addi %0, %c8_i32_14 : i32
    %21 = arith.cmpi sle, %1, %20 : i32
    %c8_i32_15 = arith.constant 8 : i32
    %22 = arith.addi %1, %c8_i32_15 : i32
    %23 = arith.cmpi sgt, %22, %0 : i32
    %24 = arith.andi %21, %23 : i1
    %25 = arith.extui %24 : i1 to i32
    %c0_i32 = arith.constant 0 : i32
    %26 = arith.cmpi ne, %25, %c0_i32 : i32
    scf.if %26 {
      %30 = arith.subi %1, %0 : i32
      %31 = tpu.iota {dimensions = array<i32: 1>} : vector<8x8xi32>
      %32 = vector.broadcast %30 : i32 to vector<8x8xi32>
      %33 = arith.addi %32, %31 : vector<8x8xi32>
      %34 = tpu.iota {dimensions = array<i32: 0>} : vector<8x8xi32>
      %35 = arith.subi %33, %34 : vector<8x8xi32>
      %c0_17 = arith.constant 0 : index
      %36 = memref.load %arg3[%c0_17] : memref<1xf32, #tpu.memory_space<smem>>
      %c0_i32_18 = arith.constant 0 : i32
      %37 = vector.broadcast %c0_i32_18 : i32 to vector<8x8xi32>
      %38 = arith.cmpi eq, %35, %37 : vector<8x8xi32>
      %cst_19 = arith.constant 0.000000e+00 : f32
      %39 = vector.broadcast %cst_19 : f32 to vector<8x8xf32>
      %40 = arith.select %38, %39, %19 : vector<8x8xi1>, vector<8x8xf32>
      %c1_i32 = arith.constant 1 : i32
      %41 = vector.broadcast %c1_i32 : i32 to vector<8x8xi32>
      %42 = arith.cmpi eq, %35, %41 : vector<8x8xi32>
      %43 = vector.broadcast %36 : f32 to vector<8x8xf32>
      %44 = arith.mulf %40, %43 : vector<8x8xf32>
      %45 = arith.select %42, %44, %40 : vector<8x8xi1>, vector<8x8xf32>
      %c0_20 = arith.constant 0 : index
      %c0_21 = arith.constant 0 : index
      %c0_22 = arith.constant 0 : index
      %46 = vector.load %arg8[%c0_20, %c0_21, %c0_22] : memref<1x8x8xf32, #tpu.memory_space<vmem>>, vector<1x8x8xf32>
      %47 = vector.shape_cast %46 : vector<1x8x8xf32> to vector<8x8xf32>
      %48 = vector.shape_cast %45 : vector<8x8xf32> to vector<1x8x8xf32>
      tpu.vector_store %arg8[%c0_20, %c0_21, %c0_22], %48 {strides = array<i32>} : memref<1x8x8xf32, #tpu.memory_space<vmem>>, vector<1x8x8xf32>,
    } else {
    }
    %true = arith.constant true
    %27 = arith.xori %24, %true : i1
    %28 = arith.extui %27 : i1 to i32
    %c0_i32_16 = arith.constant 0 : i32
    %29 = arith.cmpi ne, %28, %c0_i32_16 : i32
    scf.if %29 {
      %c0_17 = arith.constant 0 : index
      %c0_18 = arith.constant 0 : index
      %c0_19 = arith.constant 0 : index
      %30 = vector.load %arg8[%c0_17, %c0_18, %c0_19] : memref<1x8x8xf32, #tpu.memory_space<vmem>>, vector<1x8x8xf32>
      %31 = vector.shape_cast %30 : vector<1x8x8xf32> to vector<8x8xf32>
      %32 = vector.shape_cast %19 : vector<8x8xf32> to vector<1x8x8xf32>
      tpu.vector_store %arg8[%c0_17, %c0_18, %c0_19], %32 {strides = array<i32>} : memref<1x8x8xf32, #tpu.memory_space<vmem>>, vector<1x8x8xf32>,
    } else {
    }
    return
  }
  func.func @transform_0(%arg0: i32, %arg1: i32, %arg2: i32) -> i32 {
    %c0_i32 = arith.constant 0 : i32
    %c0_i32_0 = arith.constant 0 : i32
    return %c0_i32 : i32
  }
  func.func @transform_1(%arg0: i32, %arg1: i32, %arg2: i32) -> (i32, i32, i32) {
    %c0_i32 = arith.constant 0 : i32
    %c0_i32_0 = arith.constant 0 : i32
    return %arg0, %arg1, %c0_i32 : i32, i32, i32
  }
  func.func @transform_2(%arg0: i32, %arg1: i32, %arg2: i32) -> (i32, i32, i32) {
    %c0_i32 = arith.constant 0 : i32
    %c0_i32_0 = arith.constant 0 : i32
    return %arg0, %arg2, %c0_i32 : i32, i32, i32
  }
  func.func @transform_3(%arg0: i32, %arg1: i32, %arg2: i32) -> (i32, i32, i32) {
    %c0_i32 = arith.constant 0 : i32
    %c0_i32_0 = arith.constant 0 : i32
    return %arg0, %arg1, %c0_i32 : i32, i32, i32
  }
  func.func @transform_4(%arg0: i32, %arg1: i32, %arg2: i32) -> (i32, i32, i32) {
    %c0_i32 = arith.constant 0 : i32
    %c0_i32_0 = arith.constant 0 : i32
    return %arg0, %c0_i32, %arg2 : i32, i32, i32
  }
  func.func @transform_5(%arg0: i32, %arg1: i32, %arg2: i32) -> (i32, i32, i32) {
    %c0_i32 = arith.constant 0 : i32
    return %arg0, %arg1, %arg2 : i32, i32, i32
  }
}

</mosaic_0001>

<llo_original>
// kernel: tpu_custom_call.1
$region0: #{tpu_custom_call.1}
  #allocation0 [shape = 'u32[]', space=smem, size = 0x4, offset = 0x4, fixed_abs, tag = 'smem constant byte address 0x4 - core index']
  #allocation1 [shape = 'u32[144,128]{1,0:T(1,128)}', space=vmem, size = 0x12000, scoped, tag = 'internal scratch']
  #allocation2 [shape = 'f32[1]{0:T(128)S(6)}', space=smem, size = 0x200, scoped, tag = 'scoped memory for tpu_custom_call.1']
  %s0 = inlined_call_operand.<no memory space> [shape: f32[1], index: 0, kind: input, shape index: {}]
  %s1 = inlined_call_operand.vmem [shape: f32[2,8,32], index: 1, kind: input, shape index: {}]
  %s2 = inlined_call_operand.hbm [shape: f32[2,8,32], index: 2, kind: input, shape index: {}]
  %s3 = inlined_call_operand.vmem [shape: f32[2,8,1], index: 3, kind: input, shape index: {}]
  %s4 = inlined_call_operand.vmem [shape: f32[2,1,8], index: 4, kind: input, shape index: {}]
  %s5 = inlined_call_operand.hbm [shape: f32[2,8,8], index: 5, kind: output, shape index: {}]
  %s6 = sld [smem:[#allocation0]]
  $region65: #{tpu_custom_call.1} parent=0
    _
  %s8 = ssub.s32 1, %s6
  %s9 = scalar_select 0, %s8, %s6
  %10 = sst [smem:[#allocation2]] %s0
  $region1: #{tpu_custom_call.1} parent=0
    #allocation3 [shape = 'u8[8192]{0}', space=vmem, size = 0x2000, scoped, tag = 'input window, operand 2']
    #allocation4 [shape = 's32[2]{0}', space=sflag, size = 0x8, scoped, tag = 'scoped memory for tpu_custom_call.1']
    #allocation5 [shape = 's32[2]{0}', space=sflag, size = 0x8, scoped, tag = 'scoped memory for tpu_custom_call.1']
    #allocation6 [shape = 'u8[8192]{0}', space=vmem, size = 0x2000, scoped, tag = 'output window, operand 0']
    %11 = vsyncpa [#allocation4], 0
    %s12 = scalar_lea.sflag [#allocation4], 1
    %13 = vsyncpa %s12, 0
    %14 = vsyncpa [#allocation5], 0
    %s15 = scalar_lea.sflag [#allocation5], 1
    %16 = vsyncpa %s15, 0
    loop: start=0, step=1, limit=4
    $region2: #{tpu_custom_call.1} parent=1 // loop_pre_header
      _
    $region3: #{tpu_custom_call.1} parent=1 // loop_header
      %s18 = sphi 0, %s22
      %p19 = scmp.ge.s32.totalorder %s18, 4
      %s25 = sphi 0, %s44
      %s26 = sphi 0, %s40
      %s27 = sphi 0, %s36
      %s28 = sphi 0, %s25
      %s29 = sphi 0, %s26
      %s30 = sphi 0, %s27
      %s31 = sphi 0, %s28
      %s32 = sphi 0, %s29
      %s33 = sphi 0, %s30
      %s45 = sphi 0, %s45
      %s47 = sphi 0, %s45
      %s48 = sphi 0, %s47
      %s62 = sphi 0, %s48
      %s70 = sphi 0, %s72
      %s73 = sphi 0, %s70
      %s74 = sphi 0, %s73
      %s90 = sphi 0, %s74
      %s98 = sphi 0, %s100
      %s101 = sphi 0, %s98
      %s102 = sphi 0, %s101
      %s118 = sphi 0, %s102
      %s126 = sphi 0, %s128
      %s129 = sphi 0, %s126
      %s130 = sphi 0, %s129
      %s146 = sphi 0, %s130
      %s154 = sphi 0, %s156
      %s157 = sphi 0, %s154
      %s158 = sphi 0, %s157
      %s174 = sphi 0, %s158
      %s184 = sphi 0, %s186
      %s187 = sphi 0, %s184
      %s188 = sphi 0, %s187
      %s204 = sphi 0, %s188
    $region4: #{tpu_custom_call.1} parent=1 // loop_header_branch
      %21 = sbr.rel (%p19) target = $region8
    $region5: #{tpu_custom_call.1} parent=1 // loop_body
      %s23 = ssub.s32 %s18, 1
      %s24 = ssub.s32 %s18, 2
      %s34 = sadd.s32 1, %s27
      %p35 = scmp.ge.s32.totalorder %s34, 1
      %s36 = scalar_select %p35, 0, %s34
      %s37 = sadd.s32 1, %s26
      %s38 = scalar_select %p35, %s37, %s26
      %p39 = scmp.ge.s32.totalorder %s38, 1
      %s40 = scalar_select %p39, 0, %s38
      %s41 = sadd.s32 1, %s25
      %s42 = scalar_select %p39, %s41, %s25
      %p43 = scmp.ge.s32.totalorder %s42, 2
      %s44 = scalar_select %p43, 0, %s42
      %s46 = sadd.s32 %s45, 1
      %p49 = scmp.eq.s32.totalorder %s18, 1
      %p50 = scmp.ne.s32.totalorder %s45, %s47
      %p51 = scmp.eq.s32.totalorder %s18, 0
      %p52 = por %p50, %p51
      %p53 = scmp.ne.s32.totalorder %s45, %s47
      %p54 = scmp.eq.s32.totalorder %s23, 1
      %p55 = por %p53, %p54
      %p56 = scmp.ne.s32.totalorder %s47, %s48
      %p57 = scmp.eq.s32.totalorder %s23, 0
      %p58 = por %p56, %p57
      %p59 = scmp.ne.s32.totalorder %s47, %s48
      %p60 = scmp.eq.s32.totalorder %s24, 1
      %p61 = por %p59, %p60
      %p63 = scmp.ne.s32.totalorder %s48, %s62
      %p64 = scmp.eq.s32.totalorder %s24, 0
      %p65 = por %p63, %p64
      %s66 = ssub.s32 %s25, %s44
      %s67 = ssub.s32 %s26, %s40
      %s68 = sor.u32 %s66, %s67
      %p69 = scmp.eq.s32.totalorder %s68, 0
      %s71 = sadd.s32 %s70, 1
      %s72 = scalar_select %p69, %s70, %s71
      %p75 = pneg %p69
      %p76 = scmp.eq.s32.totalorder %s18, 1
      %p77 = por %p75, %p76
      %p78 = scmp.ne.s32.totalorder %s70, %s73
      %p79 = scmp.eq.s32.totalorder %s18, 0
      %p80 = por %p78, %p79
      %p81 = scmp.ne.s32.totalorder %s70, %s73
      %p82 = scmp.eq.s32.totalorder %s23, 1
      %p83 = por %p81, %p82
      %p84 = scmp.ne.s32.totalorder %s73, %s74
      %p85 = scmp.eq.s32.totalorder %s23, 0
      %p86 = por %p84, %p85
      %p87 = scmp.ne.s32.totalorder %s73, %s74
      %p88 = scmp.eq.s32.totalorder %s24, 1
      %p89 = por %p87, %p88
      %p91 = scmp.ne.s32.totalorder %s74, %s90
      %p92 = scmp.eq.s32.totalorder %s24, 0
      %p93 = por %p91, %p92
      %s94 = ssub.s32 %s25, %s44
      %s95 = ssub.s32 %s27, %s36
      %s96 = sor.u32 %s94, %s95
      %p97 = scmp.eq.s32.totalorder %s96, 0
      %s99 = sadd.s32 %s98, 1
      %s100 = scalar_select %p97, %s98, %s99
      %p103 = pneg %p97
      %p104 = scmp.eq.s32.totalorder %s18, 1
      %p105 = por %p103, %p104
      %p106 = scmp.ne.s32.totalorder %s98, %s101
      %p107 = scmp.eq.s32.totalorder %s18, 0
      %p108 = por %p106, %p107
      %p109 = scmp.ne.s32.totalorder %s98, %s101
      %p110 = scmp.eq.s32.totalorder %s23, 1
      %p111 = por %p109, %p110
      %p112 = scmp.ne.s32.totalorder %s101, %s102
      %p113 = scmp.eq.s32.totalorder %s23, 0
      %p114 = por %p112, %p113
      %p115 = scmp.ne.s32.totalorder %s101, %s102
      %p116 = scmp.eq.s32.totalorder %s24, 1
      %p117 = por %p115, %p116
      %p119 = scmp.ne.s32.totalorder %s102, %s118
      %p120 = scmp.eq.s32.totalorder %s24, 0
      %p121 = por %p119, %p120
      %s122 = ssub.s32 %s25, %s44
      %s123 = ssub.s32 %s26, %s40
      %s124 = sor.u32 %s122, %s123
      %p125 = scmp.eq.s32.totalorder %s124, 0
      %s127 = sadd.s32 %s126, 1
      %s128 = scalar_select %p125, %s126, %s127
      %p131 = pneg %p125
      %p132 = scmp.eq.s32.totalorder %s18, 1
      %p133 = por %p131, %p132
      %p134 = scmp.ne.s32.totalorder %s126, %s129
      %p135 = scmp.eq.s32.totalorder %s18, 0
      %p136 = por %p134, %p135
      %p137 = scmp.ne.s32.totalorder %s126, %s129
      %p138 = scmp.eq.s32.totalorder %s23, 1
      %p139 = por %p137, %p138
      %p140 = scmp.ne.s32.totalorder %s129, %s130
      %p141 = scmp.eq.s32.totalorder %s23, 0
      %p142 = por %p140, %p141
      %p143 = scmp.ne.s32.totalorder %s129, %s130
      %p144 = scmp.eq.s32.totalorder %s24, 1
      %p145 = por %p143, %p144
      %p147 = scmp.ne.s32.totalorder %s130, %s146
      %p148 = scmp.eq.s32.totalorder %s24, 0
      %p149 = por %p147, %p148
      %s150 = ssub.s32 %s25, %s44
      %s151 = ssub.s32 %s27, %s36
      %s152 = sor.u32 %s150, %s151
      %p153 = scmp.eq.s32.totalorder %s152, 0
      %s155 = sadd.s32 %s154, 1
      %s156 = scalar_select %p153, %s154, %s155
      %p159 = pneg %p153
      %p160 = scmp.eq.s32.totalorder %s18, 1
      %p161 = por %p159, %p160
      %p162 = scmp.ne.s32.totalorder %s154, %s157
      %p163 = scmp.eq.s32.totalorder %s18, 0
      %p164 = por %p162, %p163
      %p165 = scmp.ne.s32.totalorder %s154, %s157
      %p166 = scmp.eq.s32.totalorder %s23, 1
      %p167 = por %p165, %p166
      %p168 = scmp.ne.s32.totalorder %s157, %s158
      %p169 = scmp.eq.s32.totalorder %s23, 0
      %p170 = por %p168, %p169
      %p171 = scmp.ne.s32.totalorder %s157, %s158
      %p172 = scmp.eq.s32.totalorder %s24, 1
      %p173 = por %p171, %p172
      %p175 = scmp.ne.s32.totalorder %s158, %s174
      %p176 = scmp.eq.s32.totalorder %s24, 0
      %p177 = por %p175, %p176
      %s178 = ssub.s32 %s25, %s44
      %s179 = ssub.s32 %s26, %s40
      %s180 = sor.u32 %s178, %s179
      %s181 = ssub.s32 %s27, %s36
      %s182 = sor.u32 %s180, %s181
      %p183 = scmp.eq.s32.totalorder %s182, 0
      %s185 = sadd.s32 %s184, 1
      %s186 = scalar_select %p183, %s184, %s185
      %p189 = pneg %p183
      %p190 = scmp.eq.s32.totalorder %s18, 1
      %p191 = por %p189, %p190
      %p192 = scmp.ne.s32.totalorder %s184, %s187
      %p193 = scmp.eq.s32.totalorder %s18, 0
      %p194 = por %p192, %p193
      %p195 = scmp.ne.s32.totalorder %s184, %s187
      %p196 = scmp.eq.s32.totalorder %s23, 1
      %p197 = por %p195, %p196
      %p198 = scmp.ne.s32.totalorder %s187, %s188
      %p199 = scmp.eq.s32.totalorder %s23, 0
      %p200 = por %p198, %p199
      %p201 = scmp.ne.s32.totalorder %s187, %s188
      %p202 = scmp.eq.s32.totalorder %s24, 1
      %p203 = por %p201, %p202
      %p205 = scmp.ne.s32.totalorder %s188, %s204
      %p206 = scmp.eq.s32.totalorder %s24, 0
      %p207 = por %p205, %p206
      %p208 = scmp.le.s32.totalorder 1, %s18
      %p209 = scmp.lt.s32.totalorder %s18, 3
      %p210 = pnand %p208, %p209
      %p211 = pneg %p210
      // Predicated region
      $region9: #{tpu_custom_call.1} parent=5 // pred_check
        _
      $region10: #{tpu_custom_call.1} parent=5 // pred_check_branch
        %213 = sbr.rel (%p210) target = $region12
      $region11: #{tpu_custom_call.1} parent=5 // pred_region
        %s214 = ssub.s32 %s18, 1
        // Predicated region
        $region13: #{tpu_custom_call.1} parent=11 // pred_check
          %p215 = pneg %p58
        $region14: #{tpu_custom_call.1} parent=11 // pred_check_branch
          %217 = sbr.rel (%p215) target = $region16
        $region15: #{tpu_custom_call.1} parent=11 // pred_region
          _
        $region16: #{tpu_custom_call.1} parent=11 // pred_fallthru
          _
      $region12: #{tpu_custom_call.1} parent=5 // pred_fallthru
        _
      %p218 = scmp.lt.s32.totalorder %s18, 2
      // Predicated region
      $region17: #{tpu_custom_call.1} parent=5 // pred_check
        %p219 = pneg %p218
      $region18: #{tpu_custom_call.1} parent=5 // pred_check_branch
        %221 = sbr.rel (%p219) target = $region20
      $region19: #{tpu_custom_call.1} parent=5 // pred_region
        // Predicated region
        $region21: #{tpu_custom_call.1} parent=19 // pred_check
          %p222 = pneg %p80
        $region22: #{tpu_custom_call.1} parent=19 // pred_check_branch
          %224 = sbr.rel (%p222) target = $region24
        $region23: #{tpu_custom_call.1} parent=19 // pred_region
          %p225 = scmp.lt.s32.totalorder %s25, 1
          %s226 = scalar_select %p225, %s25, 1
          %p227 = scmp.lt.s32.totalorder %s26, 0
          %s228 = scalar_select %p227, %s26, 0
          %s229 = sadd.s32 %s228, %s226
          %s230 = smul.addr %s229, 8
          %s231 = scalar_lea.vmem %s1, %s230
        $region24: #{tpu_custom_call.1} parent=19 // pred_fallthru
          _
        // Predicated region
        $region25: #{tpu_custom_call.1} parent=19 // pred_check
          %p232 = pneg %p108
        $region26: #{tpu_custom_call.1} parent=19 // pred_check_branch
          %234 = sbr.rel (%p232) target = $region28
        $region27: #{tpu_custom_call.1} parent=19 // pred_region
          %s235 = sand.u32 %s98, 1
          %s236 = scalar_lea.sflag [#allocation4], %s235
          %s237 = sand.u32 %s98, 1
          %s238 = smul.addr %s237, 8
          %s239 = scalar_lea.vmem [#allocation3], %s238
          %s241 = ssub.s32 128, 128
          %242 = vsyncadd %s236, %s241
          %s243 = sadd.s32 %s27, %s25
          %s244 = smul.addr %s243, 128
          %s245 = scalar_lea.hbm %s2, %s244
          %s247 = sshll.u32 %s239, 4
          %s248 = int_to_ptr.vmem [resolvable:$true] %s247
          %250 = dma.hbm_to_vmem [thread:$0]  %s245, 128, %s248, %s236
        $region28: #{tpu_custom_call.1} parent=19 // pred_fallthru
          _
        // Predicated region
        $region29: #{tpu_custom_call.1} parent=19 // pred_check
          %p251 = pneg %p136
        $region30: #{tpu_custom_call.1} parent=19 // pred_check_branch
          %253 = sbr.rel (%p251) target = $region32
        $region31: #{tpu_custom_call.1} parent=19 // pred_region
          %p254 = scmp.lt.s32.totalorder %s25, 1
          %s255 = scalar_select %p254, %s25, 1
          %p256 = scmp.lt.s32.totalorder %s26, 0
          %s257 = scalar_select %p256, %s26, 0
          %s258 = sadd.s32 %s257, %s255
          %s259 = smul.addr %s258, 8
          %s260 = scalar_lea.vmem %s3, %s259
        $region32: #{tpu_custom_call.1} parent=19 // pred_fallthru
          _
        // Predicated region
        $region33: #{tpu_custom_call.1} parent=19 // pred_check
          %p261 = pneg %p164
        $region34: #{tpu_custom_call.1} parent=19 // pred_check_branch
          %263 = sbr.rel (%p261) target = $region36
        $region35: #{tpu_custom_call.1} parent=19 // pred_region
          %p264 = scmp.lt.s32.totalorder %s25, 1
          %s265 = scalar_select %p264, %s25, 1
          %p266 = scmp.lt.s32.totalorder %s27, 0
          %s267 = scalar_select %p266, %s27, 0
          %s268 = sadd.s32 %s267, %s265
          %s269 = scalar_lea.vmem %s4, %s268
        $region36: #{tpu_custom_call.1} parent=19 // pred_fallthru
          _
      $region20: #{tpu_custom_call.1} parent=5 // pred_fallthru
        _
      %p270 = scmp.le.s32.totalorder 1, %s18
      %p271 = scmp.lt.s32.totalorder %s18, 3
      %p272 = pnand %p270, %p271
      %p273 = pneg %p272
      // Predicated region
      $region37: #{tpu_custom_call.1} parent=5 // pred_check
        _
      $region38: #{tpu_custom_call.1} parent=5 // pred_check_branch
        %275 = sbr.rel (%p272) target = $region40
      $region39: #{tpu_custom_call.1} parent=5 // pred_region
        %s276 = ssub.s32 %s18, 1
        %s277 = sand.u32 %s101, 1
        %s278 = scalar_lea.sflag [#allocation4], %s277
        %s279 = sand.u32 %s101, 1
        %s280 = smul.addr %s279, 8
        %s281 = scalar_lea.vmem [#allocation3], %s280
        // Predicated region
        $region41: #{tpu_custom_call.1} parent=39 // pred_check
          %p282 = pneg %p114
        $region42: #{tpu_custom_call.1} parent=39 // pred_check_branch
          %284 = sbr.rel (%p282) target = $region44
        $region43: #{tpu_custom_call.1} parent=39 // pred_region
          %285 = dma.done %s278, 128
        $region44: #{tpu_custom_call.1} parent=39 // pred_fallthru
          _
        %p286 = pneg %p58
        %p287 = pneg %p55
        %p288 = scmp.lt.s32.totalorder %s28, 1
        %s289 = scalar_select %p288, %s28, 1
        %p290 = scmp.lt.s32.totalorder %s29, 0
        %s291 = scalar_select %p290, %s29, 0
        %s292 = sadd.s32 %s291, %s289
        %s293 = smul.addr %s292, 8
        %s294 = scalar_lea.vmem %s1, %s293
        %p295 = pneg %p86
        %p296 = pneg %p83
        %s297 = sand.u32 %s101, 1
        %s298 = scalar_lea.sflag [#allocation4], %s297
        %s299 = sand.u32 %s101, 1
        %s300 = smul.addr %s299, 8
        %s301 = scalar_lea.vmem [#allocation3], %s300
        %p302 = pneg %p114
        %p303 = pneg %p111
        %p304 = scmp.lt.s32.totalorder %s28, 1
        %s305 = scalar_select %p304, %s28, 1
        %p306 = scmp.lt.s32.totalorder %s29, 0
        %s307 = scalar_select %p306, %s29, 0
        %s308 = sadd.s32 %s307, %s305
        %s309 = smul.addr %s308, 8
        %s310 = scalar_lea.vmem %s3, %s309
        %p311 = pneg %p142
        %p312 = pneg %p139
        %p313 = scmp.lt.s32.totalorder %s28, 1
        %s314 = scalar_select %p313, %s28, 1
        %p315 = scmp.lt.s32.totalorder %s30, 0
        %s316 = scalar_select %p315, %s30, 0
        %s317 = sadd.s32 %s316, %s314
        %s318 = scalar_lea.vmem %s4, %s317
        %p319 = pneg %p170
        %p320 = pneg %p167
        %p321 = pneg %p200
        %p322 = pneg %p197
        %s323 = sand.u32 %s187, 1
        %s324 = scalar_lea.sflag [#allocation5], %s323
        %s325 = sand.u32 %s187, 1
        %s326 = smul.addr %s325, 8
        %s327 = scalar_lea.vmem [#allocation6], %s326
        %p328 = scmp.lt.s32.totalorder %s28, 1
        %s329 = scalar_select %p328, %s28, 1
        %p330 = scmp.lt.s32.totalorder %s29, 0
        %s331 = scalar_select %p330, %s29, 0
        %s332 = sadd.s32 %s331, %s329
        %s333 = smul.addr %s332, 8
        %s334 = scalar_lea.vmem %s1, %s333
        %p335 = scmp.lt.s32.totalorder %s28, 1
        %s336 = scalar_select %p335, %s28, 1
        %p337 = scmp.lt.s32.totalorder %s29, 0
        %s338 = scalar_select %p337, %s29, 0
        %s339 = sadd.s32 %s338, %s336
        %s340 = smul.addr %s339, 8
        %s341 = scalar_lea.vmem %s3, %s340
        %p342 = scmp.lt.s32.totalorder %s28, 1
        %s343 = scalar_select %p342, %s28, 1
        %p344 = scmp.lt.s32.totalorder %s30, 0
        %s345 = scalar_select %p344, %s30, 0
        %s346 = sadd.s32 %s345, %s343
        %s347 = scalar_lea.vmem %s4, %s346
        %s348 = smul.u32 %s29, 8
        %s349 = smul.u32 %s30, 8
        %v350 = vld [vmem:[%s334] sm:$0xff]
        %v351 = vld [vmem:[%s281] sm:$0xff]
        %vm352 = vcmask 261120
        %v354 = vsel %vm352, %v350, 0
        %v357 = vsel %vm352, %v351, 0
        %359 = vmatprep.subr.mxu0 0.0
        %360 = vmatpush1.xpose.msra.mxu0 %v357
        %361 = vmatprep.subr.mxu0 0.0
        %362 = vmatpush1.xpose.msra.mxu0 0.0
        %363 = vmatprep.subr.mxu0 0.0
        %364 = vmatpush1.xpose.msra.mxu0 0.0
        %365 = vmatprep.subr.mxu0 0.0
        %366 = vmatpush1.xpose.msra.mxu0 0.0
        %367 = vmatprep.subr.mxu0 0.0
        %368 = vmatpush1.xpose.msra.mxu0 0.0
        %369 = vmatprep.subr.mxu0 0.0
        %370 = vmatpush1.xpose.msra.mxu0 0.0
        %371 = vmatprep.subr.mxu0 0.0
        %372 = vmatpush1.xpose.msra.mxu0 0.0
        %373 = vmatprep.subr.mxu0 0.0
        %374 = vmatpush1.xpose.msra.mxu0 0.0
        %375 = vmatprep.subr.mxu0 0.0
        %376 = vmatpush1.xpose.msra.mxu0 0.0
        %377 = vmatprep.subr.mxu0 0.0
        %378 = vmatpush1.xpose.msra.mxu0 0.0
        %379 = vmatprep.subr.mxu0 0.0
        %380 = vmatpush1.xpose.msra.mxu0 0.0
        %381 = vmatprep.subr.mxu0 0.0
        %382 = vmatpush1.xpose.msra.mxu0 0.0
        %383 = vmatprep.subr.mxu0 0.0
        %384 = vmatpush1.xpose.msra.mxu0 0.0
        %385 = vmatprep.subr.mxu0 0.0
        %386 = vmatpush1.xpose.msra.mxu0 0.0
        %387 = vmatprep.subr.mxu0 0.0
        %388 = vmatpush1.xpose.msra.mxu0 0.0
        %389 = vmatprep.subr.mxu0 0.0
        %390 = vmatpush1.xpose.msra.mxu0 0.0
        %391 = vmatprep.subr.mxu0 0.0
        %392 = vmatpush1.xpose.msra.mxu0 0.0
        %393 = vmatprep.subr.mxu0 0.0
        %394 = vmatpush1.xpose.msra.mxu0 0.0
        %395 = vmatprep.subr.mxu0 0.0
        %396 = vmatpush1.xpose.msra.mxu0 0.0
        %397 = vmatprep.subr.mxu0 0.0
        %398 = vmatpush1.xpose.msra.mxu0 0.0
        %399 = vmatprep.subr.mxu0 0.0
        %400 = vmatpush1.xpose.msra.mxu0 0.0
        %401 = vmatprep.subr.mxu0 0.0
        %402 = vmatpush1.xpose.msra.mxu0 0.0
        %403 = vmatprep.subr.mxu0 0.0
        %404 = vmatpush1.xpose.msra.mxu0 0.0
        %405 = vmatprep.subr.mxu0 0.0
        %406 = vmatpush1.xpose.msra.mxu0 0.0
        %407 = vmatprep.subr.mxu0 0.0
        %408 = vmatpush1.xpose.msra.mxu0 0.0
        %409 = vmatprep.subr.mxu0 0.0
        %410 = vmatpush1.xpose.msra.mxu0 0.0
        %411 = vmatprep.subr.mxu0 0.0
        %412 = vmatpush1.xpose.msra.mxu0 0.0
        %413 = vmatprep.subr.mxu0 0.0
        %414 = vmatpush1.xpose.msra.mxu0 0.0
        %415 = vmatprep.subr.mxu0 0.0
        %416 = vmatpush1.xpose.msra.mxu0 0.0
        %417 = vmatprep.subr.mxu0 0.0
        %418 = vmatpush1.xpose.msra.mxu0 0.0
        %419 = vmatprep.subr.mxu0 0.0
        %420 = vmatpush1.xpose.msra.mxu0 0.0
        %421 = vmatprep.subr.mxu0 0.0
        %422 = vmatpush1.xpose.msra.mxu0 0.0
        %423 = vmatprep.mubr.f32.mxu0 0.0
        %424 = vmatmul.mubr.f32.gmra.mrb[0].mxu0 %v354
        %v425 = vpop.f32.mrb[0].mxu0
        %v426 = vadd.f32 0.0, %v425
        %v427 = vpop.f32.mrb[0].mxu0
        %428 = vdwg.mxu0
        %v429 = vld [vmem:[%s341] sm:$0xff]
        %v430 = vld [vmem:[%s347] sm:$0x1]
        %432 = vset.pattern.permute.xlu0 0
        %433 = vperm.xlu0 %432, %v429
        %v434 = vpop.permute.xlu0 %433
        %v437 = vlaneseq
        %v438 = vshrl.u32 %v437, 7
        %v439 = vsub.s32 0, %v438
        %v440 = vrot.slane %v430, %v439
        %v442 = vadd.f32 %v434, %v440
        %v443 = vmul.f32 %v426, 2.0
        %v444 = vsub.f32 %v442, %v443
        %v445 = vmax.f32 %v444, 0.0
        %v446 = vrsqrt.pop %v445
        %v447 = vmul.f32 %v445, %v446
        %vm448 = vcmp.eq.f32.partialorder %v445, inf
        %v449 = vsel %vm448, %v445, %v447
        %vm450 = vcmp.eq.f32.partialorder %v445, 0.0
        %v451 = vand.u32 %v445, 2147483648
        %v452 = vsel %vm450, %v451, %v449
        %s453 = sadd.s32 %s348, 8
        %p454 = scmp.le.s32.totalorder %s349, %s453
        %s455 = sadd.s32 %s349, 8
        %p456 = scmp.gt.s32.totalorder %s455, %s348
        %p457 = pnand %p454, %p456
        %p458 = pneg %p457
        // Predicated region
        $region45: #{tpu_custom_call.1} parent=39 // pred_check
          _
        $region46: #{tpu_custom_call.1} parent=39 // pred_check_branch
          %460 = sbr.rel (%p457) target = $region48
        $region47: #{tpu_custom_call.1} parent=39 // pred_region
          %s461 = ssub.s32 %s349, %s348
          %v462 = vlaneseq
          %v463 = vand.u32 %v462, 127
          %v464 = vstv %s461
          %v465 = vadd.s32 %v464, %v463
          %v466 = vlaneseq
          %v467 = vshrl.u32 %v466, 7
          %v468 = vsub.s32 %v465, %v467
          %s469 = sld [smem:[#allocation2]]
          %vm470 = vcmp.eq.s32.totalorder %v468, 0
          %v471 = vsel %vm470, 0.0, %v452
          %vm472 = vcmp.eq.s32.totalorder %v468, 1
          %v473 = vstv %s469
          %v474 = vmul.f32 %v471, %v473
          %v475 = vsel %vm472, %v474, %v471
          %vm476 = vcmask 64512
          %477 = vst.msk [vmem:[%s327] sm:$0xff] %vm476, %v475
        $region48: #{tpu_custom_call.1} parent=39 // pred_fallthru
          _
        %p478 = pneg %p458
        // Predicated region
        $region49: #{tpu_custom_call.1} parent=39 // pred_check
          _
        $region50: #{tpu_custom_call.1} parent=39 // pred_check_branch
          %480 = sbr.rel (%p458) target = $region52
        $region51: #{tpu_custom_call.1} parent=39 // pred_region
          %vm481 = vcmask 64512
          %482 = vst.msk [vmem:[%s327] sm:$0xff] %vm481, %v452
        $region52: #{tpu_custom_call.1} parent=39 // pred_fallthru
          _
        %s483 = sand.u32 %s187, 1
        %s484 = scalar_lea.sflag [#allocation5], %s483
        %s485 = sand.u32 %s187, 1
        %s486 = smul.addr %s485, 8
        %s487 = scalar_lea.vmem [#allocation6], %s486
        // Predicated region
        $region53: #{tpu_custom_call.1} parent=39 // pred_check
          %p488 = pneg %p197
        $region54: #{tpu_custom_call.1} parent=39 // pred_check_branch
          %490 = sbr.rel (%p488) target = $region56
        $region55: #{tpu_custom_call.1} parent=39 // pred_region
          %s492 = ssub.s32 128, 128
          %493 = vsyncadd %s484, %s492
          %s494 = sadd.s32 %s30, %s29
          %s495 = sadd.s32 %s494, %s28
          %s496 = smul.addr %s495, 128
          %s497 = scalar_lea.hbm %s5, %s496
          %s499 = sshll.u32 %s487, 4
          %s500 = int_to_ptr.vmem [resolvable:$true] %s499
          %502 = dma.vmem_to_hbm [thread:$0]  %s500, 128, %s497, %s484
        $region56: #{tpu_custom_call.1} parent=39 // pred_fallthru
          _
      $region40: #{tpu_custom_call.1} parent=5 // pred_fallthru
        _
      %p503 = scmp.le.s32.totalorder 2, %s18
      // Predicated region
      $region57: #{tpu_custom_call.1} parent=5 // pred_check
        %p504 = pneg %p503
      $region58: #{tpu_custom_call.1} parent=5 // pred_check_branch
        %506 = sbr.rel (%p504) target = $region60
      $region59: #{tpu_custom_call.1} parent=5 // pred_region
        %s507 = ssub.s32 %s18, 2
        // Predicated region
        $region61: #{tpu_custom_call.1} parent=59 // pred_check
          %p508 = pneg %p203
        $region62: #{tpu_custom_call.1} parent=59 // pred_check_branch
          %510 = sbr.rel (%p508) target = $region64
        $region63: #{tpu_custom_call.1} parent=59 // pred_region
          %s511 = sand.u32 %s188, 1
          %s512 = scalar_lea.sflag [#allocation5], %s511
          %s513 = sand.u32 %s188, 1
          %s514 = smul.addr %s513, 8
          %s515 = scalar_lea.vmem [#allocation6], %s514
          %516 = dma.done %s512, 128
        $region64: #{tpu_custom_call.1} parent=59 // pred_fallthru
          _
      $region60: #{tpu_custom_call.1} parent=5 // pred_fallthru
        _
    $region6: #{tpu_custom_call.1} parent=1 // loop_footer
      %s22 = sadd.s32 1, %s18
    $region7: #{tpu_custom_call.1} parent=1 // loop_footer_branch
      %17 = sbr.rel target = $region3
    $region8: #{tpu_custom_call.1} parent=1 // loop_exit
      _
    %517 = vsyncpa [#allocation4], 1
    %s518 = scalar_lea.sflag [#allocation4], 1
    %519 = vsyncpa %s518, 1
    %520 = vsyncpa [#allocation5], 1
    %s521 = scalar_lea.sflag [#allocation5], 1
    %522 = vsyncpa %s521, 1

</llo_original>
